<compile_context>
chip_gen: v7x
topology: tpu7x:2x2x1
jax: 0.10.0
libtpu: 0.0.40
codegen_flags: <defaults>
</compile_context>

<pallas_src>
import functools
import math

import jax
import jax.numpy as jnp
from jax.experimental import pallas as pl
from jax.experimental.pallas import tpu as pltpu


def _round_up(n: int, m: int) -> int:
    return ((n + m - 1) // m) * m


# ----------------------------- kernel --------------------------------------

def _dilate_erode_kernel(x_ref, wc_ref, out_ref, *, tf, e_cols, unroll):
    """Fused dilate+erode running max over the F axis.

    x_ref  : (TB, TF)  input tile   (sublane = batch, lane = feature)
    wc_ref : (TF, Cp)  fused weights [W_ero | W_dil | -inf pad]
    out_ref: (TB, Cp)  output tile; doubles as the accumulator across the f
                       grid axis (its block index ignores f).
    """
    f = pl.program_id(1)
    nf = pl.num_programs(1)
    dtype = out_ref.dtype
    tc = out_ref.shape[-1]

    # Per-lane sign: -1 on erode lanes (lane < E), +1 elsewhere.  Hoisted out
    # of the fori loop (loop invariant).
    lane = jax.lax.broadcasted_iota(jnp.int32, (1, tc), 1)
    sgn = jnp.where(lane < e_cols,
                    jnp.asarray(-1.0, dtype), jnp.asarray(1.0, dtype))

    @pl.when(f == 0)
    def _init():
        out_ref[...] = jnp.full(out_ref.shape, -jnp.inf, dtype)

    def body(i, acc):
        xi = x_ref[:, pl.ds(i, 1)]       # (TB, 1)  column i of the x tile
        wi = wc_ref[pl.ds(i, 1), :]      # (1, Cp)  row i of the fused weights
        return jnp.maximum(acc, xi * sgn + wi)

    acc = jax.lax.fori_loop(0, tf, body, out_ref[...], unroll=unroll)
    out_ref[...] = acc

    @pl.when(f == nf - 1)
    def _finish():
        # Undo the sign trick on erode lanes; padded lanes stay -inf (sliced
        # away in the wrapper).
        out_ref[...] = out_ref[...] * sgn


# --------------------------- module wrapper ---------------------------------

def build_dilate_erode(w_dil, w_ero):
    """Pad/fuse the weights ONCE and return a jitted forward(x).

    w_dil: (F, D) dilation weights, w_ero: (F, E) erosion weights (D,E >= 0,
    D+E > 0, F = in_features + 1).  forward accepts x of shape (B, F, 1) or
    (B, F) and returns (B, E + D) = concat([eroded, dilated], axis=1).
    """
    F, D = w_dil.shape
    F2, E = w_ero.shape
    assert F == F2, "weight row counts must match (in_features + 1)"
    assert D + E > 0  # TODO(synk): fully-empty output not handled

    dtype = jnp.promote_types(w_dil.dtype, w_ero.dtype)
    assert jnp.issubdtype(dtype, jnp.floating), \
        "float dtypes only (the -inf padding trick assumes floats)"
    itemsize = jnp.dtype(dtype).itemsize

    n_out = E + D
    Cp = _round_up(n_out, 128)           # joint lane padding for both outputs

    # --- reduction-axis tile plan (independent of batch) ---
    F8 = _round_up(F, 8)
    VMEM_BUDGET = 20 * 1024 * 1024

    def _footprint(tf):  # worst case TB=128, x2 double buffering per operand
        return 2 * itemsize * (128 * tf + tf * Cp + 128 * Cp)

    if F8 <= 2048 and _footprint(F8) <= VMEM_BUDGET:
        TF = F8                           # whole F in one step, weights resident
    else:
        TF = 512
        while TF > 128 and _footprint(TF) > VMEM_BUDGET:
            TF //= 2
    F_pad = _round_up(F, TF)
    nf = F_pad // TF

    # --- fused, padded weights (built exactly once) ---
    # Lanes [0, E): +W_ero (sign trick), lanes [E, E+D): W_dil, rest / padded
    # F rows: -inf so they never win the running max (x is 0 on padded rows).
    wc = jnp.full((F_pad, Cp), -jnp.inf, dtype)
    if E > 0:
        wc = wc.at[:F, :E].set(w_ero.astype(dtype))
    if D > 0:
        wc = wc.at[:F, E:E + D].set(w_dil.astype(dtype))
    wc = jax.device_put(wc)

    def _forward(x):
        if x.ndim == 3:                   # (B, F, 1) as in the PyTorch module
            x = x[..., 0]
        B = x.shape[0]
        assert x.shape[1] == F, f"expected {F} features, got {x.shape[1]}"
        xb = x.astype(dtype)

        # Batch tile: keep >= 2 b-tiles when possible (v7x megacore), cap so the
        # fori carry (TB x Cp accumulator) stays <= ~32 vregs.
        if B >= 16:
            TB = min(128, _round_up((B + 1) // 2, 8))
        else:
            TB = min(128, _round_up(max(B, 1), 8))
        max_tb = max(8, (128 * 1024 // (Cp * itemsize)) // 8 * 8)
        TB = max(8, min(TB, max_tb))
        B_pad = _round_up(B, TB)
        nb = B_pad // TB

        # Pad x only when the tile constraints require it.
        if (B_pad, F_pad) != (B, F):
            xp = jnp.zeros((B_pad, F_pad), dtype).at[:B, :F].set(xb)
        else:
            xp = xb

        carry_vregs = -(-(TB * Cp * itemsize) // 4096)
        unroll = True if TF <= 32 else (4 if carry_vregs <= 8 else 2)

        kernel = functools.partial(
            _dilate_erode_kernel, tf=TF, e_cols=E, unroll=unroll)

        cost = pl.CostEstimate(
            flops=3 * B_pad * F_pad * Cp,
            transcendentals=0,
            bytes_accessed=itemsize * (B_pad * F_pad + F_pad * Cp + B_pad * Cp))

        cparams = dict(dimension_semantics=("parallel", "arbitrary"))
        vmem_need = 2 * itemsize * (TB * TF + TF * Cp + TB * Cp)
        if vmem_need > 16 * 1024 * 1024:
            cparams["vmem_limit_bytes"] = min(vmem_need + (8 << 20), 100 << 20)

        out_p = pl.pallas_call(
            kernel,
            out_shape=jax.ShapeDtypeStruct((B_pad, Cp), dtype),
            grid_spec=pltpu.PrefetchScalarGridSpec(
                num_scalar_prefetch=0,
                grid=(nb, nf),
                in_specs=[
                    pl.BlockSpec((TB, TF), lambda b, f: (b, f)),   # x tile
                    pl.BlockSpec((TF, Cp), lambda b, f: (f, 0)),   # fused W
                ],
                out_specs=pl.BlockSpec((TB, Cp), lambda b, f: (b, 0)),
            ),
            compiler_params=pltpu.CompilerParams(**cparams),
            cost_estimate=cost,
        )(xp, wc)

        # Lane layout of the fused output is already [eroded | dilated | pad],
        # so the PyTorch concat is a single slice.
        return out_p[:B, :n_out]

    return jax.jit(_forward)


# ----------------------------- reference ------------------------------------

def xavier_uniform(key, shape, dtype=jnp.float32):
    fan_in, fan_out = shape
    bound = math.sqrt(6.0 / max(fan_in + fan_out, 1))
    return jax.random.uniform(key, shape, dtype=dtype, minval=-bound, maxval=bound)


def reference(x, w_dil, w_ero):
    # Pure-JAX reference of the PyTorch forward.
    if x.ndim == 2:
        x = x[:, :, None]
    parts = []
    if w_ero.shape[1] > 0:
        parts.append(jnp.min(x - w_ero[None, :, :], axis=1))
    else:
        parts.append(jnp.zeros((x.shape[0], 0), x.dtype))
    if w_dil.shape[1] > 0:
        parts.append(jnp.max(x + w_dil[None, :, :], axis=1))
    else:
        parts.append(jnp.zeros((x.shape[0], 0), x.dtype))
    return jnp.concatenate(parts, axis=1)


# -------------------------------- demo --------------------------------------

if __name__ == "__main__":
    key = jax.random.PRNGKey(0)
    cases = [
        # small shapes from the module spec
        dict(batch=4, in_features=16, n_dil=8, n_ero=8),
        # larger F + D/E sharing one 128-lane group (exercises padding + sign)
        dict(batch=16, in_features=300, n_dil=40, n_ero=24),
        # empty-erosion branch of the PyTorch module
        dict(batch=3, in_features=10, n_dil=12, n_ero=0),
    ]
    for idx, c in enumerate(cases):
        k = jax.random.fold_in(key, idx)
        k_x, k_d, k_e = jax.random.split(k, 3)
        Fc = c["in_features"] + 1
        w_dil = xavier_uniform(k_d, (Fc, c["n_dil"]))
        w_ero = xavier_uniform(k_e, (Fc, c["n_ero"]))
        x = jax.random.normal(k_x, (c["batch"], Fc, 1), dtype=jnp.float32)

        forward = build_dilate_erode(w_dil, w_ero)   # weight pad/fuse hoisted here
        out = jax.block_until_ready(forward(x))
        ref = reference(x, w_dil, w_ero)

        assert out.shape == (c["batch"], c["n_ero"] + c["n_dil"]), out.shape
        assert jnp.allclose(out, ref, atol=1e-6, rtol=1e-6), (
            f"case {idx}: max abs err {jnp.max(jnp.abs(out - ref))}")

    print("KERNEL_OK")
</pallas_src>

<mosaic_0001>
module attributes {stable_mosaic.version = 11 : i64} {
  func.func @_dilate_erode_kernel(%arg0: i32, %arg1: i32, %arg2: memref<8x24xf32, #tpu.memory_space<vmem>>, %arg3: memref<24x128xf32, #tpu.memory_space<vmem>>, %arg4: memref<8x128xf32, #tpu.memory_space<vmem>>) attributes {dimension_semantics = [#tpu.dimension_semantics<parallel>, #tpu.dimension_semantics<arbitrary>], iteration_bounds = array<i64: 1, 1>, scalar_prefetch = 0 : i64, scratch_operands = 0 : i64, tpu.core_type = #tpu.core_type<tc>, window_params = [{transform_indices = @transform_0, window_bounds = array<i64: 8, 24>}, {transform_indices = @transform_1, window_bounds = array<i64: 24, 128>}, {transform_indices = @transform_2, window_bounds = array<i64: 8, 128>}]} {
    %0 = tpu.iota {dimensions = array<i32: 1>} : vector<1x128xi32>
    %c8_i32 = arith.constant 8 : i32
    %1 = vector.broadcast %c8_i32 : i32 to vector<1x128xi32>
    %2 = arith.cmpi slt, %0, %1 : vector<1x128xi32>
    %cst = arith.constant -1.000000e+00 : f32
    %cst_0 = arith.constant 1.000000e+00 : f32
    %3 = vector.broadcast %cst : f32 to vector<1x128xf32>
    %4 = vector.broadcast %cst_0 : f32 to vector<1x128xf32>
    %5 = arith.select %2, %3, %4 : vector<1x128xi1>, vector<1x128xf32>
    %c0_i32 = arith.constant 0 : i32
    %6 = arith.cmpi eq, %arg1, %c0_i32 : i32
    %7 = arith.extui %6 : i1 to i32
    %c0_i32_1 = arith.constant 0 : i32
    %8 = arith.cmpi ne, %7, %c0_i32_1 : i32
    scf.if %8 {
      %cst_57 = arith.constant 0xFF800000 : f32
      %254 = vector.broadcast %cst_57 : f32 to vector<8x128xf32>
      %c0_58 = arith.constant 0 : index
      %c0_59 = arith.constant 0 : index
      %255 = vector.load %arg4[%c0_58, %c0_59] : memref<8x128xf32, #tpu.memory_space<vmem>>, vector<8x128xf32>
      tpu.vector_store %arg4[%c0_58, %c0_59], %254 {strides = array<i32>} : memref<8x128xf32, #tpu.memory_space<vmem>>, vector<8x128xf32>,
    } else {
    }
    %c0 = arith.constant 0 : index
    %c0_2 = arith.constant 0 : index
    %9 = vector.load %arg4[%c0, %c0_2] : memref<8x128xf32, #tpu.memory_space<vmem>>, vector<8x128xf32>
    %c0_i32_3 = arith.constant 0 : i32
    %c0_4 = arith.constant 0 : index
    %10 = arith.index_cast %c0_i32_3 : i32 to index
    %11 = vector.load %arg2[%c0_4, %10] : memref<8x24xf32, #tpu.memory_space<vmem>>, vector<8x1xf32>
    %12 = arith.index_cast %c0_i32_3 : i32 to index
    %c0_5 = arith.constant 0 : index
    %13 = vector.load %arg3[%12, %c0_5] : memref<24x128xf32, #tpu.memory_space<vmem>>, vector<1x128xf32>
    %14 = vector.broadcast %11 : vector<8x1xf32> to vector<8x128xf32>
    %15 = vector.broadcast %5 : vector<1x128xf32> to vector<8x128xf32>
    %16 = arith.mulf %14, %15 : vector<8x128xf32>
    %17 = vector.broadcast %13 : vector<1x128xf32> to vector<8x128xf32>
    %18 = arith.addf %16, %17 : vector<8x128xf32>
    %19 = arith.maximumf %9, %18 : vector<8x128xf32>
    %c1_i32 = arith.constant 1 : i32
    %c0_6 = arith.constant 0 : index
    %20 = arith.index_cast %c1_i32 : i32 to index
    %21 = vector.load %arg2[%c0_6, %20] : memref<8x24xf32, #tpu.memory_space<vmem>>, vector<8x1xf32>
    %22 = arith.index_cast %c1_i32 : i32 to index
    %c0_7 = arith.constant 0 : index
    %23 = vector.load %arg3[%22, %c0_7] : memref<24x128xf32, #tpu.memory_space<vmem>>, vector<1x128xf32>
    %24 = vector.broadcast %21 : vector<8x1xf32> to vector<8x128xf32>
    %25 = vector.broadcast %5 : vector<1x128xf32> to vector<8x128xf32>
    %26 = arith.mulf %24, %25 : vector<8x128xf32>
    %27 = vector.broadcast %23 : vector<1x128xf32> to vector<8x128xf32>
    %28 = arith.addf %26, %27 : vector<8x128xf32>
    %29 = arith.maximumf %19, %28 : vector<8x128xf32>
    %c2_i32 = arith.constant 2 : i32
    %c0_8 = arith.constant 0 : index
    %30 = arith.index_cast %c2_i32 : i32 to index
    %31 = vector.load %arg2[%c0_8, %30] : memref<8x24xf32, #tpu.memory_space<vmem>>, vector<8x1xf32>
    %32 = arith.index_cast %c2_i32 : i32 to index
    %c0_9 = arith.constant 0 : index
    %33 = vector.load %arg3[%32, %c0_9] : memref<24x128xf32, #tpu.memory_space<vmem>>, vector<1x128xf32>
    %34 = vector.broadcast %31 : vector<8x1xf32> to vector<8x128xf32>
    %35 = vector.broadcast %5 : vector<1x128xf32> to vector<8x128xf32>
    %36 = arith.mulf %34, %35 : vector<8x128xf32>
    %37 = vector.broadcast %33 : vector<1x128xf32> to vector<8x128xf32>
    %38 = arith.addf %36, %37 : vector<8x128xf32>
    %39 = arith.maximumf %29, %38 : vector<8x128xf32>
    %c3_i32 = arith.constant 3 : i32
    %c0_10 = arith.constant 0 : index
    %40 = arith.index_cast %c3_i32 : i32 to index
    %41 = vector.load %arg2[%c0_10, %40] : memref<8x24xf32, #tpu.memory_space<vmem>>, vector<8x1xf32>
    %42 = arith.index_cast %c3_i32 : i32 to index
    %c0_11 = arith.constant 0 : index
    %43 = vector.load %arg3[%42, %c0_11] : memref<24x128xf32, #tpu.memory_space<vmem>>, vector<1x128xf32>
    %44 = vector.broadcast %41 : vector<8x1xf32> to vector<8x128xf32>
    %45 = vector.broadcast %5 : vector<1x128xf32> to vector<8x128xf32>
    %46 = arith.mulf %44, %45 : vector<8x128xf32>
    %47 = vector.broadcast %43 : vector<1x128xf32> to vector<8x128xf32>
    %48 = arith.addf %46, %47 : vector<8x128xf32>
    %49 = arith.maximumf %39, %48 : vector<8x128xf32>
    %c4_i32 = arith.constant 4 : i32
    %c0_12 = arith.constant 0 : index
    %50 = arith.index_cast %c4_i32 : i32 to index
    %51 = vector.load %arg2[%c0_12, %50] : memref<8x24xf32, #tpu.memory_space<vmem>>, vector<8x1xf32>
    %52 = arith.index_cast %c4_i32 : i32 to index
    %c0_13 = arith.constant 0 : index
    %53 = vector.load %arg3[%52, %c0_13] : memref<24x128xf32, #tpu.memory_space<vmem>>, vector<1x128xf32>
    %54 = vector.broadcast %51 : vector<8x1xf32> to vector<8x128xf32>
    %55 = vector.broadcast %5 : vector<1x128xf32> to vector<8x128xf32>
    %56 = arith.mulf %54, %55 : vector<8x128xf32>
    %57 = vector.broadcast %53 : vector<1x128xf32> to vector<8x128xf32>
    %58 = arith.addf %56, %57 : vector<8x128xf32>
    %59 = arith.maximumf %49, %58 : vector<8x128xf32>
    %c5_i32 = arith.constant 5 : i32
    %c0_14 = arith.constant 0 : index
    %60 = arith.index_cast %c5_i32 : i32 to index
    %61 = vector.load %arg2[%c0_14, %60] : memref<8x24xf32, #tpu.memory_space<vmem>>, vector<8x1xf32>
    %62 = arith.index_cast %c5_i32 : i32 to index
    %c0_15 = arith.constant 0 : index
    %63 = vector.load %arg3[%62, %c0_15] : memref<24x128xf32, #tpu.memory_space<vmem>>, vector<1x128xf32>
    %64 = vector.broadcast %61 : vector<8x1xf32> to vector<8x128xf32>
    %65 = vector.broadcast %5 : vector<1x128xf32> to vector<8x128xf32>
    %66 = arith.mulf %64, %65 : vector<8x128xf32>
    %67 = vector.broadcast %63 : vector<1x128xf32> to vector<8x128xf32>
    %68 = arith.addf %66, %67 : vector<8x128xf32>
    %69 = arith.maximumf %59, %68 : vector<8x128xf32>
    %c6_i32 = arith.constant 6 : i32
    %c0_16 = arith.constant 0 : index
    %70 = arith.index_cast %c6_i32 : i32 to index
    %71 = vector.load %arg2[%c0_16, %70] : memref<8x24xf32, #tpu.memory_space<vmem>>, vector<8x1xf32>
    %72 = arith.index_cast %c6_i32 : i32 to index
    %c0_17 = arith.constant 0 : index
    %73 = vector.load %arg3[%72, %c0_17] : memref<24x128xf32, #tpu.memory_space<vmem>>, vector<1x128xf32>
    %74 = vector.broadcast %71 : vector<8x1xf32> to vector<8x128xf32>
    %75 = vector.broadcast %5 : vector<1x128xf32> to vector<8x128xf32>
    %76 = arith.mulf %74, %75 : vector<8x128xf32>
    %77 = vector.broadcast %73 : vector<1x128xf32> to vector<8x128xf32>
    %78 = arith.addf %76, %77 : vector<8x128xf32>
    %79 = arith.maximumf %69, %78 : vector<8x128xf32>
    %c7_i32 = arith.constant 7 : i32
    %c0_18 = arith.constant 0 : index
    %80 = arith.index_cast %c7_i32 : i32 to index
    %81 = vector.load %arg2[%c0_18, %80] : memref<8x24xf32, #tpu.memory_space<vmem>>, vector<8x1xf32>
    %82 = arith.index_cast %c7_i32 : i32 to index
    %c0_19 = arith.constant 0 : index
    %83 = vector.load %arg3[%82, %c0_19] : memref<24x128xf32, #tpu.memory_space<vmem>>, vector<1x128xf32>
    %84 = vector.broadcast %81 : vector<8x1xf32> to vector<8x128xf32>
    %85 = vector.broadcast %5 : vector<1x128xf32> to vector<8x128xf32>
    %86 = arith.mulf %84, %85 : vector<8x128xf32>
    %87 = vector.broadcast %83 : vector<1x128xf32> to vector<8x128xf32>
    %88 = arith.addf %86, %87 : vector<8x128xf32>
    %89 = arith.maximumf %79, %88 : vector<8x128xf32>
    %c8_i32_20 = arith.constant 8 : i32
    %c0_21 = arith.constant 0 : index
    %90 = arith.index_cast %c8_i32_20 : i32 to index
    %91 = vector.load %arg2[%c0_21, %90] : memref<8x24xf32, #tpu.memory_space<vmem>>, vector<8x1xf32>
    %92 = arith.index_cast %c8_i32_20 : i32 to index
    %c0_22 = arith.constant 0 : index
    %93 = vector.load %arg3[%92, %c0_22] : memref<24x128xf32, #tpu.memory_space<vmem>>, vector<1x128xf32>
    %94 = vector.broadcast %91 : vector<8x1xf32> to vector<8x128xf32>
    %95 = vector.broadcast %5 : vector<1x128xf32> to vector<8x128xf32>
    %96 = arith.mulf %94, %95 : vector<8x128xf32>
    %97 = vector.broadcast %93 : vector<1x128xf32> to vector<8x128xf32>
    %98 = arith.addf %96, %97 : vector<8x128xf32>
    %99 = arith.maximumf %89, %98 : vector<8x128xf32>
    %c9_i32 = arith.constant 9 : i32
    %c0_23 = arith.constant 0 : index
    %100 = arith.index_cast %c9_i32 : i32 to index
    %101 = vector.load %arg2[%c0_23, %100] : memref<8x24xf32, #tpu.memory_space<vmem>>, vector<8x1xf32>
    %102 = arith.index_cast %c9_i32 : i32 to index
    %c0_24 = arith.constant 0 : index
    %103 = vector.load %arg3[%102, %c0_24] : memref<24x128xf32, #tpu.memory_space<vmem>>, vector<1x128xf32>
    %104 = vector.broadcast %101 : vector<8x1xf32> to vector<8x128xf32>
    %105 = vector.broadcast %5 : vector<1x128xf32> to vector<8x128xf32>
    %106 = arith.mulf %104, %105 : vector<8x128xf32>
    %107 = vector.broadcast %103 : vector<1x128xf32> to vector<8x128xf32>
    %108 = arith.addf %106, %107 : vector<8x128xf32>
    %109 = arith.maximumf %99, %108 : vector<8x128xf32>
    %c10_i32 = arith.constant 10 : i32
    %c0_25 = arith.constant 0 : index
    %110 = arith.index_cast %c10_i32 : i32 to index
    %111 = vector.load %arg2[%c0_25, %110] : memref<8x24xf32, #tpu.memory_space<vmem>>, vector<8x1xf32>
    %112 = arith.index_cast %c10_i32 : i32 to index
    %c0_26 = arith.constant 0 : index
    %113 = vector.load %arg3[%112, %c0_26] : memref<24x128xf32, #tpu.memory_space<vmem>>, vector<1x128xf32>
    %114 = vector.broadcast %111 : vector<8x1xf32> to vector<8x128xf32>
    %115 = vector.broadcast %5 : vector<1x128xf32> to vector<8x128xf32>
    %116 = arith.mulf %114, %115 : vector<8x128xf32>
    %117 = vector.broadcast %113 : vector<1x128xf32> to vector<8x128xf32>
    %118 = arith.addf %116, %117 : vector<8x128xf32>
    %119 = arith.maximumf %109, %118 : vector<8x128xf32>
    %c11_i32 = arith.constant 11 : i32
    %c0_27 = arith.constant 0 : index
    %120 = arith.index_cast %c11_i32 : i32 to index
    %121 = vector.load %arg2[%c0_27, %120] : memref<8x24xf32, #tpu.memory_space<vmem>>, vector<8x1xf32>
    %122 = arith.index_cast %c11_i32 : i32 to index
    %c0_28 = arith.constant 0 : index
    %123 = vector.load %arg3[%122, %c0_28] : memref<24x128xf32, #tpu.memory_space<vmem>>, vector<1x128xf32>
    %124 = vector.broadcast %121 : vector<8x1xf32> to vector<8x128xf32>
    %125 = vector.broadcast %5 : vector<1x128xf32> to vector<8x128xf32>
    %126 = arith.mulf %124, %125 : vector<8x128xf32>
    %127 = vector.broadcast %123 : vector<1x128xf32> to vector<8x128xf32>
    %128 = arith.addf %126, %127 : vector<8x128xf32>
    %129 = arith.maximumf %119, %128 : vector<8x128xf32>
    %c12_i32 = arith.constant 12 : i32
    %c0_29 = arith.constant 0 : index
    %130 = arith.index_cast %c12_i32 : i32 to index
    %131 = vector.load %arg2[%c0_29, %130] : memref<8x24xf32, #tpu.memory_space<vmem>>, vector<8x1xf32>
    %132 = arith.index_cast %c12_i32 : i32 to index
    %c0_30 = arith.constant 0 : index
    %133 = vector.load %arg3[%132, %c0_30] : memref<24x128xf32, #tpu.memory_space<vmem>>, vector<1x128xf32>
    %134 = vector.broadcast %131 : vector<8x1xf32> to vector<8x128xf32>
    %135 = vector.broadcast %5 : vector<1x128xf32> to vector<8x128xf32>
    %136 = arith.mulf %134, %135 : vector<8x128xf32>
    %137 = vector.broadcast %133 : vector<1x128xf32> to vector<8x128xf32>
    %138 = arith.addf %136, %137 : vector<8x128xf32>
    %139 = arith.maximumf %129, %138 : vector<8x128xf32>
    %c13_i32 = arith.constant 13 : i32
    %c0_31 = arith.constant 0 : index
    %140 = arith.index_cast %c13_i32 : i32 to index
    %141 = vector.load %arg2[%c0_31, %140] : memref<8x24xf32, #tpu.memory_space<vmem>>, vector<8x1xf32>
    %142 = arith.index_cast %c13_i32 : i32 to index
    %c0_32 = arith.constant 0 : index
    %143 = vector.load %arg3[%142, %c0_32] : memref<24x128xf32, #tpu.memory_space<vmem>>, vector<1x128xf32>
    %144 = vector.broadcast %141 : vector<8x1xf32> to vector<8x128xf32>
    %145 = vector.broadcast %5 : vector<1x128xf32> to vector<8x128xf32>
    %146 = arith.mulf %144, %145 : vector<8x128xf32>
    %147 = vector.broadcast %143 : vector<1x128xf32> to vector<8x128xf32>
    %148 = arith.addf %146, %147 : vector<8x128xf32>
    %149 = arith.maximumf %139, %148 : vector<8x128xf32>
    %c14_i32 = arith.constant 14 : i32
    %c0_33 = arith.constant 0 : index
    %150 = arith.index_cast %c14_i32 : i32 to index
    %151 = vector.load %arg2[%c0_33, %150] : memref<8x24xf32, #tpu.memory_space<vmem>>, vector<8x1xf32>
    %152 = arith.index_cast %c14_i32 : i32 to index
    %c0_34 = arith.constant 0 : index
    %153 = vector.load %arg3[%152, %c0_34] : memref<24x128xf32, #tpu.memory_space<vmem>>, vector<1x128xf32>
    %154 = vector.broadcast %151 : vector<8x1xf32> to vector<8x128xf32>
    %155 = vector.broadcast %5 : vector<1x128xf32> to vector<8x128xf32>
    %156 = arith.mulf %154, %155 : vector<8x128xf32>
    %157 = vector.broadcast %153 : vector<1x128xf32> to vector<8x128xf32>
    %158 = arith.addf %156, %157 : vector<8x128xf32>
    %159 = arith.maximumf %149, %158 : vector<8x128xf32>
    %c15_i32 = arith.constant 15 : i32
    %c0_35 = arith.constant 0 : index
    %160 = arith.index_cast %c15_i32 : i32 to index
    %161 = vector.load %arg2[%c0_35, %160] : memref<8x24xf32, #tpu.memory_space<vmem>>, vector<8x1xf32>
    %162 = arith.index_cast %c15_i32 : i32 to index
    %c0_36 = arith.constant 0 : index
    %163 = vector.load %arg3[%162, %c0_36] : memref<24x128xf32, #tpu.memory_space<vmem>>, vector<1x128xf32>
    %164 = vector.broadcast %161 : vector<8x1xf32> to vector<8x128xf32>
    %165 = vector.broadcast %5 : vector<1x128xf32> to vector<8x128xf32>
    %166 = arith.mulf %164, %165 : vector<8x128xf32>
    %167 = vector.broadcast %163 : vector<1x128xf32> to vector<8x128xf32>
    %168 = arith.addf %166, %167 : vector<8x128xf32>
    %169 = arith.maximumf %159, %168 : vector<8x128xf32>
    %c16_i32 = arith.constant 16 : i32
    %c0_37 = arith.constant 0 : index
    %170 = arith.index_cast %c16_i32 : i32 to index
    %171 = vector.load %arg2[%c0_37, %170] : memref<8x24xf32, #tpu.memory_space<vmem>>, vector<8x1xf32>
    %172 = arith.index_cast %c16_i32 : i32 to index
    %c0_38 = arith.constant 0 : index
    %173 = vector.load %arg3[%172, %c0_38] : memref<24x128xf32, #tpu.memory_space<vmem>>, vector<1x128xf32>
    %174 = vector.broadcast %171 : vector<8x1xf32> to vector<8x128xf32>
    %175 = vector.broadcast %5 : vector<1x128xf32> to vector<8x128xf32>
    %176 = arith.mulf %174, %175 : vector<8x128xf32>
    %177 = vector.broadcast %173 : vector<1x128xf32> to vector<8x128xf32>
    %178 = arith.addf %176, %177 : vector<8x128xf32>
    %179 = arith.maximumf %169, %178 : vector<8x128xf32>
    %c17_i32 = arith.constant 17 : i32
    %c0_39 = arith.constant 0 : index
    %180 = arith.index_cast %c17_i32 : i32 to index
    %181 = vector.load %arg2[%c0_39, %180] : memref<8x24xf32, #tpu.memory_space<vmem>>, vector<8x1xf32>
    %182 = arith.index_cast %c17_i32 : i32 to index
    %c0_40 = arith.constant 0 : index
    %183 = vector.load %arg3[%182, %c0_40] : memref<24x128xf32, #tpu.memory_space<vmem>>, vector<1x128xf32>
    %184 = vector.broadcast %181 : vector<8x1xf32> to vector<8x128xf32>
    %185 = vector.broadcast %5 : vector<1x128xf32> to vector<8x128xf32>
    %186 = arith.mulf %184, %185 : vector<8x128xf32>
    %187 = vector.broadcast %183 : vector<1x128xf32> to vector<8x128xf32>
    %188 = arith.addf %186, %187 : vector<8x128xf32>
    %189 = arith.maximumf %179, %188 : vector<8x128xf32>
    %c18_i32 = arith.constant 18 : i32
    %c0_41 = arith.constant 0 : index
    %190 = arith.index_cast %c18_i32 : i32 to index
    %191 = vector.load %arg2[%c0_41, %190] : memref<8x24xf32, #tpu.memory_space<vmem>>, vector<8x1xf32>
    %192 = arith.index_cast %c18_i32 : i32 to index
    %c0_42 = arith.constant 0 : index
    %193 = vector.load %arg3[%192, %c0_42] : memref<24x128xf32, #tpu.memory_space<vmem>>, vector<1x128xf32>
    %194 = vector.broadcast %191 : vector<8x1xf32> to vector<8x128xf32>
    %195 = vector.broadcast %5 : vector<1x128xf32> to vector<8x128xf32>
    %196 = arith.mulf %194, %195 : vector<8x128xf32>
    %197 = vector.broadcast %193 : vector<1x128xf32> to vector<8x128xf32>
    %198 = arith.addf %196, %197 : vector<8x128xf32>
    %199 = arith.maximumf %189, %198 : vector<8x128xf32>
    %c19_i32 = arith.constant 19 : i32
    %c0_43 = arith.constant 0 : index
    %200 = arith.index_cast %c19_i32 : i32 to index
    %201 = vector.load %arg2[%c0_43, %200] : memref<8x24xf32, #tpu.memory_space<vmem>>, vector<8x1xf32>
    %202 = arith.index_cast %c19_i32 : i32 to index
    %c0_44 = arith.constant 0 : index
    %203 = vector.load %arg3[%202, %c0_44] : memref<24x128xf32, #tpu.memory_space<vmem>>, vector<1x128xf32>
    %204 = vector.broadcast %201 : vector<8x1xf32> to vector<8x128xf32>
    %205 = vector.broadcast %5 : vector<1x128xf32> to vector<8x128xf32>
    %206 = arith.mulf %204, %205 : vector<8x128xf32>
    %207 = vector.broadcast %203 : vector<1x128xf32> to vector<8x128xf32>
    %208 = arith.addf %206, %207 : vector<8x128xf32>
    %209 = arith.maximumf %199, %208 : vector<8x128xf32>
    %c20_i32 = arith.constant 20 : i32
    %c0_45 = arith.constant 0 : index
    %210 = arith.index_cast %c20_i32 : i32 to index
    %211 = vector.load %arg2[%c0_45, %210] : memref<8x24xf32, #tpu.memory_space<vmem>>, vector<8x1xf32>
    %212 = arith.index_cast %c20_i32 : i32 to index
    %c0_46 = arith.constant 0 : index
    %213 = vector.load %arg3[%212, %c0_46] : memref<24x128xf32, #tpu.memory_space<vmem>>, vector<1x128xf32>
    %214 = vector.broadcast %211 : vector<8x1xf32> to vector<8x128xf32>
    %215 = vector.broadcast %5 : vector<1x128xf32> to vector<8x128xf32>
    %216 = arith.mulf %214, %215 : vector<8x128xf32>
    %217 = vector.broadcast %213 : vector<1x128xf32> to vector<8x128xf32>
    %218 = arith.addf %216, %217 : vector<8x128xf32>
    %219 = arith.maximumf %209, %218 : vector<8x128xf32>
    %c21_i32 = arith.constant 21 : i32
    %c0_47 = arith.constant 0 : index
    %220 = arith.index_cast %c21_i32 : i32 to index
    %221 = vector.load %arg2[%c0_47, %220] : memref<8x24xf32, #tpu.memory_space<vmem>>, vector<8x1xf32>
    %222 = arith.index_cast %c21_i32 : i32 to index
    %c0_48 = arith.constant 0 : index
    %223 = vector.load %arg3[%222, %c0_48] : memref<24x128xf32, #tpu.memory_space<vmem>>, vector<1x128xf32>
    %224 = vector.broadcast %221 : vector<8x1xf32> to vector<8x128xf32>
    %225 = vector.broadcast %5 : vector<1x128xf32> to vector<8x128xf32>
    %226 = arith.mulf %224, %225 : vector<8x128xf32>
    %227 = vector.broadcast %223 : vector<1x128xf32> to vector<8x128xf32>
    %228 = arith.addf %226, %227 : vector<8x128xf32>
    %229 = arith.maximumf %219, %228 : vector<8x128xf32>
    %c22_i32 = arith.constant 22 : i32
    %c0_49 = arith.constant 0 : index
    %230 = arith.index_cast %c22_i32 : i32 to index
    %231 = vector.load %arg2[%c0_49, %230] : memref<8x24xf32, #tpu.memory_space<vmem>>, vector<8x1xf32>
    %232 = arith.index_cast %c22_i32 : i32 to index
    %c0_50 = arith.constant 0 : index
    %233 = vector.load %arg3[%232, %c0_50] : memref<24x128xf32, #tpu.memory_space<vmem>>, vector<1x128xf32>
    %234 = vector.broadcast %231 : vector<8x1xf32> to vector<8x128xf32>
    %235 = vector.broadcast %5 : vector<1x128xf32> to vector<8x128xf32>
    %236 = arith.mulf %234, %235 : vector<8x128xf32>
    %237 = vector.broadcast %233 : vector<1x128xf32> to vector<8x128xf32>
    %238 = arith.addf %236, %237 : vector<8x128xf32>
    %239 = arith.maximumf %229, %238 : vector<8x128xf32>
    %c23_i32 = arith.constant 23 : i32
    %c0_51 = arith.constant 0 : index
    %240 = arith.index_cast %c23_i32 : i32 to index
    %241 = vector.load %arg2[%c0_51, %240] : memref<8x24xf32, #tpu.memory_space<vmem>>, vector<8x1xf32>
    %242 = arith.index_cast %c23_i32 : i32 to index
    %c0_52 = arith.constant 0 : index
    %243 = vector.load %arg3[%242, %c0_52] : memref<24x128xf32, #tpu.memory_space<vmem>>, vector<1x128xf32>
    %244 = vector.broadcast %241 : vector<8x1xf32> to vector<8x128xf32>
    %245 = vector.broadcast %5 : vector<1x128xf32> to vector<8x128xf32>
    %246 = arith.mulf %244, %245 : vector<8x128xf32>
    %247 = vector.broadcast %243 : vector<1x128xf32> to vector<8x128xf32>
    %248 = arith.addf %246, %247 : vector<8x128xf32>
    %249 = arith.maximumf %239, %248 : vector<8x128xf32>
    %c24_i32 = arith.constant 24 : i32
    %c0_53 = arith.constant 0 : index
    %c0_54 = arith.constant 0 : index
    %250 = vector.load %arg4[%c0_53, %c0_54] : memref<8x128xf32, #tpu.memory_space<vmem>>, vector<8x128xf32>
    tpu.vector_store %arg4[%c0_53, %c0_54], %249 {strides = array<i32>} : memref<8x128xf32, #tpu.memory_space<vmem>>, vector<8x128xf32>,
    %c0_i32_55 = arith.constant 0 : i32
    %251 = arith.cmpi eq, %arg1, %c0_i32_55 : i32
    %252 = arith.extui %251 : i1 to i32
    %c0_i32_56 = arith.constant 0 : i32
    %253 = arith.cmpi ne, %252, %c0_i32_56 : i32
    scf.if %253 {
      %c0_57 = arith.constant 0 : index
      %c0_58 = arith.constant 0 : index
      %254 = vector.load %arg4[%c0_57, %c0_58] : memref<8x128xf32, #tpu.memory_space<vmem>>, vector<8x128xf32>
      %255 = vector.broadcast %5 : vector<1x128xf32> to vector<8x128xf32>
      %256 = arith.mulf %254, %255 : vector<8x128xf32>
      %c0_59 = arith.constant 0 : index
      %c0_60 = arith.constant 0 : index
      %257 = vector.load %arg4[%c0_59, %c0_60] : memref<8x128xf32, #tpu.memory_space<vmem>>, vector<8x128xf32>
      tpu.vector_store %arg4[%c0_59, %c0_60], %256 {strides = array<i32>} : memref<8x128xf32, #tpu.memory_space<vmem>>, vector<8x128xf32>,
    } else {
    }
    return
  }
  func.func @transform_0(%arg0: i32, %arg1: i32) -> (i32, i32) {
    %c0_i32 = arith.constant 0 : i32
    return %arg0, %arg1 : i32, i32
  }
  func.func @transform_1(%arg0: i32, %arg1: i32) -> (i32, i32) {
    %c0_i32 = arith.constant 0 : i32
    %c0_i32_0 = arith.constant 0 : i32
    return %arg1, %c0_i32 : i32, i32
  }
  func.func @transform_2(%arg0: i32, %arg1: i32) -> (i32, i32) {
    %c0_i32 = arith.constant 0 : i32
    %c0_i32_0 = arith.constant 0 : i32
    return %arg0, %c0_i32 : i32, i32
  }
}

</mosaic_0001>

<llo_original>
// kernel: _forward.1
$region0: #{_forward.1}
  #allocation0 [shape = 'u32[]', space=smem, size = 0x4, offset = 0x4, fixed_abs, tag = 'smem constant byte address 0x4 - core index']
  #allocation1 [shape = 'u32[144,128]{1,0:T(1,128)}', space=vmem, size = 0x12000, scoped, tag = 'internal scratch']
  %s0 = inlined_call_operand.vmem [shape: f32[8,24], index: 0, kind: input, shape index: {}]
  %s1 = inlined_call_operand.hbm [shape: f32[24,128], index: 1, kind: input, shape index: {}]
  %s2 = inlined_call_operand.vmem [shape: f32[8,128], index: 2, kind: output, shape index: {}]
  %s3 = sld [smem:[#allocation0]]
  $region30: #{_forward.1} parent=0
    _
  %s5 = ssub.s32 1, %s3
  %s6 = scalar_select 0, %s5, %s3
  $region1: #{_forward.1} parent=0
    #allocation2 [shape = 'u8[12288]{0}', space=vmem, size = 0x3000, scoped, tag = 'input window, operand 1, single buffered']
    #allocation3 [shape = 's32[1]{0}', space=sflag, size = 0x4, scoped, tag = 'scoped memory for _forward.1']
    %7 = vsyncpa [#allocation3], 0
    // Predicated region
    $region2: #{_forward.1} parent=1 // pred_check
      _
    $region3: #{_forward.1} parent=1 // pred_check_branch
      %9 = sbr.rel (0) target = $region5
    $region4: #{_forward.1} parent=1 // pred_region
      _
    $region5: #{_forward.1} parent=1 // pred_fallthru
      _
    // Predicated region
    $region6: #{_forward.1} parent=1 // pred_check
      _
    $region7: #{_forward.1} parent=1 // pred_check_branch
      %11 = sbr.rel (0) target = $region9
    $region8: #{_forward.1} parent=1 // pred_region
      %s13 = ssub.s32 384, 384
      %14 = vsyncadd [#allocation3], %s13
      %s15 = sshll.u32 [#allocation2], 4
      %s16 = int_to_ptr.vmem [resolvable:$true] %s15
      %21 = dma.hbm_to_vmem [thread:$0]  %s1, 384, %s16, [#allocation3], 128, 128, 8
    $region9: #{_forward.1} parent=1 // pred_fallthru
      _
    // Predicated region
    $region10: #{_forward.1} parent=1 // pred_check
      _
    $region11: #{_forward.1} parent=1 // pred_check_branch
      %23 = sbr.rel (0) target = $region13
    $region12: #{_forward.1} parent=1 // pred_region
      %24 = dma.done [#allocation3], 384
    $region13: #{_forward.1} parent=1 // pred_fallthru
      _
    %v25 = vlaneseq
    %v26 = vand.u32 %v25, 127
    %vm27 = vcmp.lt.s32.totalorder %v26, 8
    %v28 = vsel %vm27, -1.0, 1.0
    %p29 = scmp.eq.s32.totalorder 0, 0
    // Predicated region
    $region14: #{_forward.1} parent=1 // pred_check
      %p30 = pneg %p29
    $region15: #{_forward.1} parent=1 // pred_check_branch
      %32 = sbr.rel (%p30) target = $region17
    $region16: #{_forward.1} parent=1 // pred_region
      %33 = vst [vmem:[%s2] sm:$0xff] -inf
    $region17: #{_forward.1} parent=1 // pred_fallthru
      _
    %v34 = vld [vmem:[%s2] sm:$0xff]
    %v35 = vld [vmem:[%s0] sm:$0xff]
    %v36 = vld [vmem:[#allocation2] sm:$0x1]
    %38 = vset.pattern.permute.xlu0 0
    %39 = vperm.xlu0 %38, %v35
    %v40 = vpop.permute.xlu0 %39
    %v42 = vmul.f32 %v40, %v28
    %v43 = vlaneseq
    %v44 = vshrl.u32 %v43, 7
    %v45 = vsub.s32 0, %v44
    %v46 = vrot.slane %v36, %v45
    %v47 = vadd.f32 %v42, %v46
    %v48 = vmax.f32 %v34, %v47
    %v49 = vld [vmem:[#allocation2 + $0x1] sm:$0x1]
    %50 = vset.pattern.permute.xlu0 1
    %51 = vperm.xlu0 %50, %v35
    %v52 = vpop.permute.xlu0 %51
    %v54 = vmul.f32 %v52, %v28
    %v55 = vlaneseq
    %v56 = vshrl.u32 %v55, 7
    %v57 = vsub.s32 0, %v56
    %v58 = vrot.slane %v49, %v57
    %v59 = vadd.f32 %v54, %v58
    %v60 = vmax.f32 %v48, %v59
    %v61 = vld [vmem:[#allocation2 + $0x2] sm:$0x1]
    %62 = vset.pattern.permute.xlu0 2
    %63 = vperm.xlu0 %62, %v35
    %v64 = vpop.permute.xlu0 %63
    %v66 = vmul.f32 %v64, %v28
    %v67 = vlaneseq
    %v68 = vshrl.u32 %v67, 7
    %v69 = vsub.s32 0, %v68
    %v70 = vrot.slane %v61, %v69
    %v71 = vadd.f32 %v66, %v70
    %v72 = vmax.f32 %v60, %v71
    %v73 = vld [vmem:[#allocation2 + $0x3] sm:$0x1]
    %74 = vset.pattern.permute.xlu0 3
    %75 = vperm.xlu0 %74, %v35
    %v76 = vpop.permute.xlu0 %75
    %v78 = vmul.f32 %v76, %v28
    %v79 = vlaneseq
    %v80 = vshrl.u32 %v79, 7
    %v81 = vsub.s32 0, %v80
    %v82 = vrot.slane %v73, %v81
    %v83 = vadd.f32 %v78, %v82
    %v84 = vmax.f32 %v72, %v83
    %v85 = vld [vmem:[#allocation2 + $0x4] sm:$0x1]
    %86 = vset.pattern.permute.xlu0 4
    %87 = vperm.xlu0 %86, %v35
    %v88 = vpop.permute.xlu0 %87
    %v90 = vmul.f32 %v88, %v28
    %v91 = vlaneseq
    %v92 = vshrl.u32 %v91, 7
    %v93 = vsub.s32 0, %v92
    %v94 = vrot.slane %v85, %v93
    %v95 = vadd.f32 %v90, %v94
    %v96 = vmax.f32 %v84, %v95
    %v97 = vld [vmem:[#allocation2 + $0x5] sm:$0x1]
    %98 = vset.pattern.permute.xlu0 5
    %99 = vperm.xlu0 %98, %v35
    %v100 = vpop.permute.xlu0 %99
    %v102 = vmul.f32 %v100, %v28
    %v103 = vlaneseq
    %v104 = vshrl.u32 %v103, 7
    %v105 = vsub.s32 0, %v104
    %v106 = vrot.slane %v97, %v105
    %v107 = vadd.f32 %v102, %v106
    %v108 = vmax.f32 %v96, %v107
    %v109 = vld [vmem:[#allocation2 + $0x6] sm:$0x1]
    %110 = vset.pattern.permute.xlu0 6
    %111 = vperm.xlu0 %110, %v35
    %v112 = vpop.permute.xlu0 %111
    %v114 = vmul.f32 %v112, %v28
    %v115 = vlaneseq
    %v116 = vshrl.u32 %v115, 7
    %v117 = vsub.s32 0, %v116
    %v118 = vrot.slane %v109, %v117
    %v119 = vadd.f32 %v114, %v118
    %v120 = vmax.f32 %v108, %v119
    %v121 = vld [vmem:[#allocation2 + $0x7] sm:$0x1]
    %122 = vset.pattern.permute.xlu0 7
    %123 = vperm.xlu0 %122, %v35
    %v124 = vpop.permute.xlu0 %123
    %v126 = vmul.f32 %v124, %v28
    %v127 = vlaneseq
    %v128 = vshrl.u32 %v127, 7
    %v129 = vsub.s32 0, %v128
    %v130 = vrot.slane %v121, %v129
    %v131 = vadd.f32 %v126, %v130
    %v132 = vmax.f32 %v120, %v131
    %v133 = vld [vmem:[#allocation2 + $0x8] sm:$0x1]
    %134 = vset.pattern.permute.xlu0 8
    %135 = vperm.xlu0 %134, %v35
    %v136 = vpop.permute.xlu0 %135
    %v138 = vmul.f32 %v136, %v28
    %v139 = vlaneseq
    %v140 = vshrl.u32 %v139, 7
    %v141 = vsub.s32 0, %v140
    %v142 = vrot.slane %v133, %v141
    %v143 = vadd.f32 %v138, %v142
    %v144 = vmax.f32 %v132, %v143
    %v145 = vld [vmem:[#allocation2 + $0x9] sm:$0x1]
    %146 = vset.pattern.permute.xlu0 9
    %147 = vperm.xlu0 %146, %v35
    %v148 = vpop.permute.xlu0 %147
    %v150 = vmul.f32 %v148, %v28
    %v151 = vlaneseq
    %v152 = vshrl.u32 %v151, 7
    %v153 = vsub.s32 0, %v152
    %v154 = vrot.slane %v145, %v153
    %v155 = vadd.f32 %v150, %v154
    %v156 = vmax.f32 %v144, %v155
    %v157 = vld [vmem:[#allocation2 + $0xa] sm:$0x1]
    %158 = vset.pattern.permute.xlu0 10
    %159 = vperm.xlu0 %158, %v35
    %v160 = vpop.permute.xlu0 %159
    %v162 = vmul.f32 %v160, %v28
    %v163 = vlaneseq
    %v164 = vshrl.u32 %v163, 7
    %v165 = vsub.s32 0, %v164
    %v166 = vrot.slane %v157, %v165
    %v167 = vadd.f32 %v162, %v166
    %v168 = vmax.f32 %v156, %v167
    %v169 = vld [vmem:[#allocation2 + $0xb] sm:$0x1]
    %170 = vset.pattern.permute.xlu0 11
    %171 = vperm.xlu0 %170, %v35
    %v172 = vpop.permute.xlu0 %171
    %v174 = vmul.f32 %v172, %v28
    %v175 = vlaneseq
    %v176 = vshrl.u32 %v175, 7
    %v177 = vsub.s32 0, %v176
    %v178 = vrot.slane %v169, %v177
    %v179 = vadd.f32 %v174, %v178
    %v180 = vmax.f32 %v168, %v179
    %v181 = vld [vmem:[#allocation2 + $0xc] sm:$0x1]
    %182 = vset.pattern.permute.xlu0 12
    %183 = vperm.xlu0 %182, %v35
    %v184 = vpop.permute.xlu0 %183
    %v186 = vmul.f32 %v184, %v28
    %v187 = vlaneseq
    %v188 = vshrl.u32 %v187, 7
    %v189 = vsub.s32 0, %v188
    %v190 = vrot.slane %v181, %v189
    %v191 = vadd.f32 %v186, %v190
    %v192 = vmax.f32 %v180, %v191
    %v193 = vld [vmem:[#allocation2 + $0xd] sm:$0x1]
    %194 = vset.pattern.permute.xlu0 13
    %195 = vperm.xlu0 %194, %v35
    %v196 = vpop.permute.xlu0 %195
    %v198 = vmul.f32 %v196, %v28
    %v199 = vlaneseq
    %v200 = vshrl.u32 %v199, 7
    %v201 = vsub.s32 0, %v200
    %v202 = vrot.slane %v193, %v201
    %v203 = vadd.f32 %v198, %v202
    %v204 = vmax.f32 %v192, %v203
    %v205 = vld [vmem:[#allocation2 + $0xe] sm:$0x1]
    %206 = vset.pattern.permute.xlu0 14
    %207 = vperm.xlu0 %206, %v35
    %v208 = vpop.permute.xlu0 %207
    %v210 = vmul.f32 %v208, %v28
    %v211 = vlaneseq
    %v212 = vshrl.u32 %v211, 7
    %v213 = vsub.s32 0, %v212
    %v214 = vrot.slane %v205, %v213
    %v215 = vadd.f32 %v210, %v214
    %v216 = vmax.f32 %v204, %v215
    %v217 = vld [vmem:[#allocation2 + $0xf] sm:$0x1]
    %218 = vset.pattern.permute.xlu0 15
    %219 = vperm.xlu0 %218, %v35
    %v220 = vpop.permute.xlu0 %219
    %v222 = vmul.f32 %v220, %v28
    %v223 = vlaneseq
    %v224 = vshrl.u32 %v223, 7
    %v225 = vsub.s32 0, %v224
    %v226 = vrot.slane %v217, %v225
    %v227 = vadd.f32 %v222, %v226
    %v228 = vmax.f32 %v216, %v227
    %v229 = vld [vmem:[#allocation2 + $0x10] sm:$0x1]
    %230 = vset.pattern.permute.xlu0 16
    %231 = vperm.xlu0 %230, %v35
    %v232 = vpop.permute.xlu0 %231
    %v234 = vmul.f32 %v232, %v28
    %v235 = vlaneseq
    %v236 = vshrl.u32 %v235, 7
    %v237 = vsub.s32 0, %v236
    %v238 = vrot.slane %v229, %v237
    %v239 = vadd.f32 %v234, %v238
    %v240 = vmax.f32 %v228, %v239
    %v241 = vld [vmem:[#allocation2 + $0x11] sm:$0x1]
    %242 = vset.pattern.permute.xlu0 17
    %243 = vperm.xlu0 %242, %v35
    %v244 = vpop.permute.xlu0 %243
    %v246 = vmul.f32 %v244, %v28
    %v247 = vlaneseq
    %v248 = vshrl.u32 %v247, 7
    %v249 = vsub.s32 0, %v248
    %v250 = vrot.slane %v241, %v249
    %v251 = vadd.f32 %v246, %v250
    %v252 = vmax.f32 %v240, %v251
    %v253 = vld [vmem:[#allocation2 + $0x12] sm:$0x1]
    %254 = vset.pattern.permute.xlu0 18
    %255 = vperm.xlu0 %254, %v35
    %v256 = vpop.permute.xlu0 %255
    %v258 = vmul.f32 %v256, %v28
    %v259 = vlaneseq
    %v260 = vshrl.u32 %v259, 7
    %v261 = vsub.s32 0, %v260
    %v262 = vrot.slane %v253, %v261
    %v263 = vadd.f32 %v258, %v262
    %v264 = vmax.f32 %v252, %v263
    %v265 = vld [vmem:[#allocation2 + $0x13] sm:$0x1]
    %266 = vset.pattern.permute.xlu0 19
    %267 = vperm.xlu0 %266, %v35
    %v268 = vpop.permute.xlu0 %267
    %v270 = vmul.f32 %v268, %v28
    %v271 = vlaneseq
    %v272 = vshrl.u32 %v271, 7
    %v273 = vsub.s32 0, %v272
    %v274 = vrot.slane %v265, %v273
    %v275 = vadd.f32 %v270, %v274
    %v276 = vmax.f32 %v264, %v275
    %v277 = vld [vmem:[#allocation2 + $0x14] sm:$0x1]
    %278 = vset.pattern.permute.xlu0 20
    %279 = vperm.xlu0 %278, %v35
    %v280 = vpop.permute.xlu0 %279
    %v282 = vmul.f32 %v280, %v28
    %v283 = vlaneseq
    %v284 = vshrl.u32 %v283, 7
    %v285 = vsub.s32 0, %v284
    %v286 = vrot.slane %v277, %v285
    %v287 = vadd.f32 %v282, %v286
    %v288 = vmax.f32 %v276, %v287
    %v289 = vld [vmem:[#allocation2 + $0x15] sm:$0x1]
    %290 = vset.pattern.permute.xlu0 21
    %291 = vperm.xlu0 %290, %v35
    %v292 = vpop.permute.xlu0 %291
    %v294 = vmul.f32 %v292, %v28
    %v295 = vlaneseq
    %v296 = vshrl.u32 %v295, 7
    %v297 = vsub.s32 0, %v296
    %v298 = vrot.slane %v289, %v297
    %v299 = vadd.f32 %v294, %v298
    %v300 = vmax.f32 %v288, %v299
    %v301 = vld [vmem:[#allocation2 + $0x16] sm:$0x1]
    %302 = vset.pattern.permute.xlu0 22
    %303 = vperm.xlu0 %302, %v35
    %v304 = vpop.permute.xlu0 %303
    %v306 = vmul.f32 %v304, %v28
    %v307 = vlaneseq
    %v308 = vshrl.u32 %v307, 7
    %v309 = vsub.s32 0, %v308
    %v310 = vrot.slane %v301, %v309
    %v311 = vadd.f32 %v306, %v310
    %v312 = vmax.f32 %v300, %v311
    %v313 = vld [vmem:[#allocation2 + $0x17] sm:$0x1]
    %314 = vset.pattern.permute.xlu0 23
    %315 = vperm.xlu0 %314, %v35
    %v316 = vpop.permute.xlu0 %315
    %v318 = vmul.f32 %v316, %v28
    %v319 = vlaneseq
    %v320 = vshrl.u32 %v319, 7
    %v321 = vsub.s32 0, %v320
    %v322 = vrot.slane %v313, %v321
    %v323 = vadd.f32 %v318, %v322
    %v324 = vmax.f32 %v312, %v323
    %325 = vst [vmem:[%s2] sm:$0xff] %v324
    // Predicated region
    $region18: #{_forward.1} parent=1 // pred_check
      %p326 = pneg %p29
    $region19: #{_forward.1} parent=1 // pred_check_branch
      %328 = sbr.rel (%p326) target = $region21
    $region20: #{_forward.1} parent=1 // pred_region
      %v329 = vld [vmem:[%s2] sm:$0xff]
      %v330 = vmul.f32 %v329, %v28
      %331 = vst [vmem:[%s2] sm:$0xff] %v330
    $region21: #{_forward.1} parent=1 // pred_fallthru
      _
    // Predicated region
    $region22: #{_forward.1} parent=1 // pred_check
      _
    $region23: #{_forward.1} parent=1 // pred_check_branch
      %333 = sbr.rel (0) target = $region25
    $region24: #{_forward.1} parent=1 // pred_region
      _
    $region25: #{_forward.1} parent=1 // pred_fallthru
      _
    // Predicated region
    $region26: #{_forward.1} parent=1 // pred_check
      _
    $region27: #{_forward.1} parent=1 // pred_check_branch
      %335 = sbr.rel (0) target = $region29
    $region28: #{_forward.1} parent=1 // pred_region
      _
    $region29: #{_forward.1} parent=1 // pred_fallthru
      _
    %336 = vsyncpa [#allocation3], 1

</llo_original>
